<compile_context>
chip_gen: v7x
topology: tpu7x:2x2x1
jax: 0.10.0
libtpu: 0.0.40
codegen_flags: <defaults>
</compile_context>

<pallas_src>
import math

import jax
import jax.numpy as jnp
from jax.experimental import pallas as pl
from jax.experimental.pallas import tpu as pltpu

# ---------------- hyper-parameters (match ArcFace defaults) ----------------
S = 30.0
M = 0.5
COS_M = math.cos(M)
SIN_M = math.sin(M)
TH = math.cos(math.pi - M)
MM = math.sin(math.pi - M) * M
EPS = 1e-12  # F.normalize default eps


def _round_up(x, m):
    return (x + m - 1) // m * m


def _pick_class_tile(n_pad, d_pad, b_pad, target, vmem_budget=24 * 1024 * 1024):
    """Largest class tile (mult of 128, divides n_pad) fitting the VMEM budget."""
    # Per class-column bytes: 2x bf16 weight buffers + 2x f32 output buffers.
    per_col = 2 * (d_pad * 2) + 2 * (b_pad * 4)
    cap = max(128, (vmem_budget // per_col) // 128 * 128)
    tn = min(target, n_pad, cap)
    tn = max(128, (tn // 128) * 128)
    while n_pad % tn:
        tn -= 128
    # Prefer >= 2 class tiles so v7x's two TensorCores both get work.
    if n_pad // tn < 2 and n_pad >= 256:
        half = (n_pad // 2) // 128 * 128
        while half >= 128 and n_pad % half:
            half -= 128
        if half >= 128:
            tn = half
    return tn


# ----------------------- stage 1: backbone stand-in --------------------------
def _feature_kernel(x_ref, wp_ref, f_ref):
    # x: [TB, C, H*W] f32, wp: [C, D_pad] f32  ->  f: [TB, D_pad] bf16
    gap = jnp.mean(x_ref[...], axis=-1)                           # [TB, C]
    feats = jnp.dot(gap, wp_ref[...],
                    preferred_element_type=jnp.float32)           # [TB, D_pad]
    # F.normalize: x / max(||x||, eps)  ==  x * rsqrt(max(sumsq, eps^2))  (EUP)
    sumsq = jnp.sum(feats * feats, axis=-1, keepdims=True)
    f_n = feats * jax.lax.rsqrt(jnp.maximum(sumsq, EPS * EPS))
    f_ref[...] = f_n.astype(jnp.bfloat16)


# -------------------------- stage 2: ArcFace head ----------------------------
def _arcface_head_kernel(lab_ref, f_ref, w_ref, out_ref):
    # lab: VMEM [B_pad, 1]     i32  (resident, padded rows = -1)
    # f:   VMEM [B_pad, D_pad] bf16 (resident across class tiles)
    # w:   VMEM [D_pad, TN]    bf16 (streamed, already L2-normalized per class)
    # out: VMEM [B_pad, TN]    f32
    j = pl.program_id(0)
    tn = out_ref.shape[-1]

    cosine = jnp.dot(f_ref[...], w_ref[...],
                     preferred_element_type=jnp.float32)          # [B_pad, TN]
    # clamp: bf16 matmul rounding can push |cos| slightly past 1.0
    sine = jnp.sqrt(jnp.clip(1.0 - cosine * cosine, 0.0, 1.0))
    phi = cosine * COS_M - sine * SIN_M
    phi = jnp.where(cosine > TH, phi, cosine - MM)

    # one-hot arithmetic -> single select; tile offset moved onto the label side
    col = jax.lax.broadcasted_iota(jnp.int32, cosine.shape, 1)
    lab_local = lab_ref[...] - j * tn                              # [B_pad, 1]
    out_ref[...] = jnp.where(col == lab_local, phi, cosine) * S


# ------------------------------ wrapper -------------------------------------
def arcface_model_forward(x, labels, w_proj, w_arc, *, class_tile=16384):
    """x: [B, C, H, W] f32 (NCHW), labels: [B] int,
    w_proj: [D, C] (backbone projection), w_arc: [N, D] (ArcFace weight)."""
    B, C, H, W = x.shape
    D = w_proj.shape[0]
    N = w_arc.shape[0]

    b_pad = _round_up(B, 16)      # bf16 sublane packing for the MXU LHS
    d_pad = _round_up(D, 16)      # contraction dim: bf16 sublane granule only
    n_pad = _round_up(N, 128)     # lane-dense output
    tn = _pick_class_tile(n_pad, d_pad, b_pad, class_tile)

    # lane-dense, pre-transposed, zero-padded operands (padding is inert)
    x_flat = jnp.pad(x.reshape(B, C, H * W).astype(jnp.float32),
                     ((0, b_pad - B), (0, 0), (0, 0)))
    wproj_t = jnp.pad(w_proj.T.astype(jnp.float32), ((0, 0), (0, d_pad - D)))

    # Pre-normalize ArcFace weights in f32 (matches F.normalize), then bf16.
    w32 = w_arc.astype(jnp.float32)
    inv_wn = jax.lax.rsqrt(
        jnp.maximum(jnp.sum(w32 * w32, axis=1, keepdims=True), EPS * EPS))
    warc_t = jnp.pad((w32 * inv_wn).T.astype(jnp.bfloat16),
                     ((0, d_pad - D), (0, n_pad - N)))

    labels_col = jnp.pad(labels.astype(jnp.int32), (0, b_pad - B),
                         constant_values=-1).reshape(b_pad, 1)

    # ---- stage 1: features, gridded over batch tiles (TB = 16 rows) ----
    tb1 = 16
    f_n = pl.pallas_call(
        _feature_kernel,
        out_shape=jax.ShapeDtypeStruct((b_pad, d_pad), jnp.bfloat16),
        grid_spec=pltpu.PrefetchScalarGridSpec(
            num_scalar_prefetch=0,
            grid=(b_pad // tb1,),
            in_specs=[
                pl.BlockSpec((tb1, C, H * W), lambda i: (i, 0, 0)),  # streamed
                pl.BlockSpec((C, d_pad), lambda i: (0, 0)),          # resident
            ],
            out_specs=pl.BlockSpec((tb1, d_pad), lambda i: (i, 0)),
        ),
        compiler_params=pltpu.CompilerParams(
            dimension_semantics=("parallel",),
            vmem_limit_bytes=32 * 1024 * 1024,
        ),
    )(x_flat, wproj_t)

    # ---- stage 2: ArcFace head, gridded over class tiles ----
    grid = (n_pad // tn,)
    cost = pl.CostEstimate(
        flops=2 * b_pad * d_pad * n_pad + 8 * b_pad * n_pad,
        transcendentals=b_pad * n_pad,
        bytes_accessed=(b_pad * d_pad * 2 + d_pad * n_pad * 2
                        + b_pad * n_pad * 4 + b_pad * 4),
    )
    logits = pl.pallas_call(
        _arcface_head_kernel,
        out_shape=jax.ShapeDtypeStruct((b_pad, n_pad), jnp.float32),
        grid_spec=pltpu.PrefetchScalarGridSpec(
            num_scalar_prefetch=0,
            grid=grid,
            in_specs=[
                pl.BlockSpec((b_pad, 1), lambda j: (0, 0)),       # labels resident
                pl.BlockSpec((b_pad, d_pad), lambda j: (0, 0)),   # f_n resident
                pl.BlockSpec((d_pad, tn), lambda j: (0, j)),      # w_arc streamed
            ],
            out_specs=pl.BlockSpec((b_pad, tn), lambda j: (0, j)),
        ),
        compiler_params=pltpu.CompilerParams(
            dimension_semantics=("parallel",),        # megacore split on v7x
            vmem_limit_bytes=32 * 1024 * 1024,        # safe on v5e/v6e/v7x
        ),
        cost_estimate=cost,
    )(labels_col, f_n, warc_t)

    return logits[:B, :N]


# --------------------------- pure-JAX reference ------------------------------
def _reference(x, labels, w_proj, w_arc):
    """Matches the kernel's numeric pipeline (f32 normalize, bf16 matmul)."""
    B, C, H, W = x.shape
    gap = jnp.mean(x.reshape(B, C, H * W).astype(jnp.float32), axis=-1)
    feats = jnp.dot(gap, w_proj.T.astype(jnp.float32))
    f_n = feats * jax.lax.rsqrt(
        jnp.maximum(jnp.sum(feats * feats, -1, keepdims=True), EPS * EPS))
    f_bf = f_n.astype(jnp.bfloat16)

    w32 = w_arc.astype(jnp.float32)
    w_n = w32 * jax.lax.rsqrt(
        jnp.maximum(jnp.sum(w32 * w32, -1, keepdims=True), EPS * EPS))
    w_bf = w_n.astype(jnp.bfloat16)

    cosine = jnp.dot(f_bf, w_bf.T, preferred_element_type=jnp.float32)
    sine = jnp.sqrt(jnp.clip(1.0 - cosine * cosine, 0.0, 1.0))
    phi = cosine * COS_M - sine * SIN_M
    phi = jnp.where(cosine > TH, phi, cosine - MM)
    one_hot = jax.nn.one_hot(labels, w_arc.shape[0], dtype=jnp.float32)
    return jnp.where(one_hot > 0.5, phi, cosine) * S


# --------------------------------- main --------------------------------------
if __name__ == "__main__":
    # small shapes consistent with the forward: images NCHW, labels per image
    B, C, H, W = 2, 4, 16, 16
    D = 32          # in_features (backbone feature dim)
    N = 100         # num_classes (top-100 hotel ids)

    key = jax.random.PRNGKey(0)
    kx, kl, kp, ka = jax.random.split(key, 4)

    x = jax.random.normal(kx, (B, C, H, W), dtype=jnp.float32)
    labels = jax.random.randint(kl, (B,), 0, N, dtype=jnp.int32)

    # backbone projection weight (deterministic init)
    w_proj = jax.random.normal(kp, (D, C), dtype=jnp.float32) * (1.0 / math.sqrt(C))
    # ArcFace weight: xavier_uniform_ over [out_features, in_features]
    bound = math.sqrt(6.0 / (N + D))
    w_arc = jax.random.uniform(ka, (N, D), minval=-bound, maxval=bound,
                               dtype=jnp.float32)

    out = arcface_model_forward(x, labels, w_proj, w_arc)
    out = jax.block_until_ready(out)

    ref = _reference(x, labels, w_proj, w_arc)
    assert out.shape == (B, N)
    assert jnp.allclose(out, ref, atol=5e-2, rtol=1e-3), "mismatch vs reference"

    print("KERNEL_OK")
</pallas_src>

<mosaic_0001>
module attributes {stable_mosaic.version = 11 : i64} {
  func.func @_feature_kernel(%arg0: i32, %arg1: memref<16x4x256xf32, #tpu.memory_space<vmem>>, %arg2: memref<4x32xf32, #tpu.memory_space<vmem>>, %arg3: memref<16x32xbf16, #tpu.memory_space<vmem>>) attributes {dimension_semantics = [#tpu.dimension_semantics<parallel>], iteration_bounds = array<i64: 1>, scalar_prefetch = 0 : i64, scratch_operands = 0 : i64, tpu.core_type = #tpu.core_type<tc>, window_params = [{transform_indices = @transform_0, window_bounds = array<i64: 16, 4, 256>}, {pipeline_mode = #tpu.pipeline_mode<synchronous>, transform_indices = @transform_1, window_bounds = array<i64: 4, 32>}, {transform_indices = @transform_2, window_bounds = array<i64: 16, 32>}]} {
    %c0 = arith.constant 0 : index
    %c0_0 = arith.constant 0 : index
    %c0_1 = arith.constant 0 : index
    %0 = vector.load %arg1[%c0, %c0_0, %c0_1] : memref<16x4x256xf32, #tpu.memory_space<vmem>>, vector<16x4x256xf32>
    %cst = arith.constant dense<0.000000e+00> : vector<16x4xf32>
    %1 = vector.multi_reduction <add>, %0, %cst [2] : vector<16x4x256xf32> to vector<16x4xf32>
    %cst_2 = arith.constant 2.560000e+02 : f32
    %2 = vector.broadcast %cst_2 : f32 to vector<16x4xf32>
    %3 = arith.divf %1, %2 : vector<16x4xf32>
    %c0_3 = arith.constant 0 : index
    %c0_4 = arith.constant 0 : index
    %4 = vector.load %arg2[%c0_3, %c0_4] : memref<4x32xf32, #tpu.memory_space<vmem>>, vector<4x32xf32>
    %cst_5 = arith.constant dense<0.000000e+00> : vector<16x32xf32>
    %5 = tpu.matmul %3, %4, %cst_5 {dimension_numbers = #tpu.dot_dimension_numbers<[1], [0], [0], [1], [0, 0, 1, 1], [], []>} : vector<16x4xf32>, vector<4x32xf32>, vector<16x32xf32> -> vector<16x32xf32>
    %6 = arith.mulf %5, %5 : vector<16x32xf32>
    %cst_6 = arith.constant dense<0.000000e+00> : vector<16xf32>
    %7 = vector.multi_reduction <add>, %6, %cst_6 [1] : vector<16x32xf32> to vector<16xf32>
    %8 = vector.shape_cast %7 : vector<16xf32> to vector<16x1xf32>
    %cst_7 = arith.constant 1.000000e-24 : f32
    %9 = vector.broadcast %cst_7 : f32 to vector<16x1xf32>
    %10 = arith.maximumf %8, %9 : vector<16x1xf32>
    %11 = math.rsqrt %10 : vector<16x1xf32>
    %12 = vector.broadcast %11 : vector<16x1xf32> to vector<16x32xf32>
    %13 = arith.mulf %5, %12 : vector<16x32xf32>
    %14 = arith.truncf %13 : vector<16x32xf32> to vector<16x32xbf16>
    %c0_8 = arith.constant 0 : index
    %c0_9 = arith.constant 0 : index
    %15 = vector.load %arg3[%c0_8, %c0_9] : memref<16x32xbf16, #tpu.memory_space<vmem>>, vector<16x32xbf16>
    tpu.vector_store %arg3[%c0_8, %c0_9], %14 {strides = array<i32>} : memref<16x32xbf16, #tpu.memory_space<vmem>>, vector<16x32xbf16>,
    return
  }
  func.func @transform_0(%arg0: i32) -> (i32, i32, i32) {
    %c0_i32 = arith.constant 0 : i32
    %c0_i32_0 = arith.constant 0 : i32
    %c0_i32_1 = arith.constant 0 : i32
    return %arg0, %c0_i32, %c0_i32_0 : i32, i32, i32
  }
  func.func @transform_1(%arg0: i32) -> (i32, i32) {
    %c0_i32 = arith.constant 0 : i32
    %c0_i32_0 = arith.constant 0 : i32
    %c0_i32_1 = arith.constant 0 : i32
    return %c0_i32, %c0_i32_0 : i32, i32
  }
  func.func @transform_2(%arg0: i32) -> (i32, i32) {
    %c0_i32 = arith.constant 0 : i32
    %c0_i32_0 = arith.constant 0 : i32
    return %arg0, %c0_i32 : i32, i32
  }
}

</mosaic_0001>

<llo_original>
// kernel: tpu_custom_call.1
$region0: #{tpu_custom_call.1}
  #allocation0 [shape = 'u32[]', space=smem, size = 0x4, offset = 0x4, fixed_abs, tag = 'smem constant byte address 0x4 - core index']
  #allocation1 [shape = 'u32[144,128]{1,0:T(1,128)}', space=vmem, size = 0x12000, scoped, tag = 'internal scratch']
  %s0 = inlined_call_operand.hbm [shape: f32[16,4,256], index: 0, kind: input, shape index: {}]
  %s1 = inlined_call_operand.hbm [shape: f32[4,32], index: 1, kind: input, shape index: {}]
  %s2 = inlined_call_operand.hbm [shape: bf16[16,32], index: 2, kind: output, shape index: {}]
  %s3 = sld [smem:[#allocation0]]
  $region26: #{tpu_custom_call.1} parent=0
    _
  %s5 = ssub.s32 1, %s3
  %s6 = scalar_select 0, %s5, %s3
  $region1: #{tpu_custom_call.1} parent=0
    #allocation2 [shape = 'u8[65536]{0}', space=vmem, size = 0x10000, scoped, tag = 'input window, operand 0, single buffered']
    #allocation3 [shape = 's32[1]{0}', space=sflag, size = 0x4, scoped, tag = 'scoped memory for tpu_custom_call.1']
    #allocation4 [shape = 's32[1]{0}', space=sflag, size = 0x4, scoped, tag = 'scoped memory for tpu_custom_call.1']
    #allocation5 [shape = 'u8[2048]{0}', space=vmem, size = 0x800, scoped, tag = 'input window, operand 1, single buffered']
    #allocation6 [shape = 's32[1]{0}', space=sflag, size = 0x4, scoped, tag = 'scoped memory for tpu_custom_call.1']
    #allocation7 [shape = 'u8[4096]{0}', space=vmem, size = 0x1000, scoped, tag = 'output window, operand 0, single buffered']
    %7 = vsyncpa [#allocation3], 0
    %8 = vsyncpa [#allocation6], 0
    %9 = vsyncpa [#allocation4], 0
    // Predicated region
    $region2: #{tpu_custom_call.1} parent=1 // pred_check
      _
    $region3: #{tpu_custom_call.1} parent=1 // pred_check_branch
      %11 = sbr.rel (0) target = $region5
    $region4: #{tpu_custom_call.1} parent=1 // pred_region
      %s13 = ssub.s32 2048, 2048
      %14 = vsyncadd [#allocation3], %s13
      %s15 = sshll.u32 [#allocation2], 4
      %s16 = int_to_ptr.vmem [resolvable:$true] %s15
      %21 = dma.hbm_to_vmem [thread:$0]  %s0, 2048, %s16, [#allocation3], 128, 128, 8
    $region5: #{tpu_custom_call.1} parent=1 // pred_fallthru
      _
    // Predicated region
    $region6: #{tpu_custom_call.1} parent=1 // pred_check
      _
    $region7: #{tpu_custom_call.1} parent=1 // pred_check_branch
      %23 = sbr.rel (0) target = $region9
    $region8: #{tpu_custom_call.1} parent=1 // pred_region
      %s25 = ssub.s32 64, 64
      %26 = vsyncadd [#allocation6], %s25
      %s28 = sshll.u32 [#allocation5], 4
      %s29 = int_to_ptr.vmem [resolvable:$true] %s28
      %31 = dma.hbm_to_vmem [thread:$0]  %s1, 64, %s29, [#allocation6]
    $region9: #{tpu_custom_call.1} parent=1 // pred_fallthru
      _
    // Predicated region
    $region10: #{tpu_custom_call.1} parent=1 // pred_check
      _
    $region11: #{tpu_custom_call.1} parent=1 // pred_check_branch
      %33 = sbr.rel (0) target = $region13
    $region12: #{tpu_custom_call.1} parent=1 // pred_region
      %34 = dma.done [#allocation3], 2048
    $region13: #{tpu_custom_call.1} parent=1 // pred_fallthru
      _
    // Predicated region
    $region14: #{tpu_custom_call.1} parent=1 // pred_check
      _
    $region15: #{tpu_custom_call.1} parent=1 // pred_check_branch
      %36 = sbr.rel (0) target = $region17
    $region16: #{tpu_custom_call.1} parent=1 // pred_region
      %37 = dma.done [#allocation6], 64
    $region17: #{tpu_custom_call.1} parent=1 // pred_fallthru
      _
    %v38 = vld [vmem:[#allocation2] sm:$0xff]
    %v39 = vld [vmem:[#allocation2 + $0x8] sm:$0xff]
    %v40 = vld [vmem:[#allocation2 + $0x10] sm:$0xff]
    %v41 = vld [vmem:[#allocation2 + $0x18] sm:$0xff]
    %v42 = vld [vmem:[#allocation2 + $0x20] sm:$0xff]
    %v43 = vld [vmem:[#allocation2 + $0x28] sm:$0xff]
    %v44 = vld [vmem:[#allocation2 + $0x30] sm:$0xff]
    %v45 = vld [vmem:[#allocation2 + $0x38] sm:$0xff]
    %v46 = vld [vmem:[#allocation2 + $0x40] sm:$0xff]
    %v47 = vld [vmem:[#allocation2 + $0x48] sm:$0xff]
    %v48 = vld [vmem:[#allocation2 + $0x50] sm:$0xff]
    %v49 = vld [vmem:[#allocation2 + $0x58] sm:$0xff]
    %v50 = vld [vmem:[#allocation2 + $0x60] sm:$0xff]
    %v51 = vld [vmem:[#allocation2 + $0x68] sm:$0xff]
    %v52 = vld [vmem:[#allocation2 + $0x70] sm:$0xff]
    %v53 = vld [vmem:[#allocation2 + $0x78] sm:$0xff]
    %v70 = vcombine.high %v38, %v38
    %v71 = vcombine.high %v39, %v39
    %v72 = vcombine.high %v40, %v40
    %v73 = vcombine.high %v41, %v41
    %v74 = vcombine.high %v42, %v42
    %v75 = vcombine.high %v43, %v43
    %v76 = vcombine.high %v44, %v44
    %v77 = vcombine.high %v45, %v45
    %v78 = vcombine.high %v46, %v46
    %v79 = vcombine.high %v47, %v47
    %v80 = vcombine.high %v48, %v48
    %v81 = vcombine.high %v49, %v49
    %v82 = vcombine.high %v50, %v50
    %v83 = vcombine.high %v51, %v51
    %v84 = vcombine.high %v52, %v52
    %v85 = vcombine.high %v53, %v53
    %vm102 = vcmask 1043456
    %v103 = vsel %vm102, %v38, 0.0
    %v104 = vsel %vm102, %v70, 0.0
    %v105 = vadd.f32 %v103, %v104
    %106 = vadd.xlane.f32.xlu0 %v105
    %v107 = vpop.xlane.xlu0 %106
    %v108 = vsel %vm102, %v39, 0.0
    %v109 = vsel %vm102, %v71, 0.0
    %v110 = vadd.f32 %v108, %v109
    %111 = vadd.xlane.f32.xlu0 %v110
    %v112 = vpop.xlane.xlu0 %111
    %v113 = vsel %vm102, %v40, 0.0
    %v114 = vsel %vm102, %v72, 0.0
    %v115 = vadd.f32 %v113, %v114
    %116 = vadd.xlane.f32.xlu0 %v115
    %v117 = vpop.xlane.xlu0 %116
    %v118 = vsel %vm102, %v41, 0.0
    %v119 = vsel %vm102, %v73, 0.0
    %v120 = vadd.f32 %v118, %v119
    %121 = vadd.xlane.f32.xlu0 %v120
    %v122 = vpop.xlane.xlu0 %121
    %v123 = vsel %vm102, %v42, 0.0
    %v124 = vsel %vm102, %v74, 0.0
    %v125 = vadd.f32 %v123, %v124
    %126 = vadd.xlane.f32.xlu0 %v125
    %v127 = vpop.xlane.xlu0 %126
    %v128 = vsel %vm102, %v43, 0.0
    %v129 = vsel %vm102, %v75, 0.0
    %v130 = vadd.f32 %v128, %v129
    %131 = vadd.xlane.f32.xlu0 %v130
    %v132 = vpop.xlane.xlu0 %131
    %v133 = vsel %vm102, %v44, 0.0
    %v134 = vsel %vm102, %v76, 0.0
    %v135 = vadd.f32 %v133, %v134
    %136 = vadd.xlane.f32.xlu0 %v135
    %v137 = vpop.xlane.xlu0 %136
    %v138 = vsel %vm102, %v45, 0.0
    %v139 = vsel %vm102, %v77, 0.0
    %v140 = vadd.f32 %v138, %v139
    %141 = vadd.xlane.f32.xlu0 %v140
    %v142 = vpop.xlane.xlu0 %141
    %v143 = vsel %vm102, %v46, 0.0
    %v144 = vsel %vm102, %v78, 0.0
    %v145 = vadd.f32 %v143, %v144
    %146 = vadd.xlane.f32.xlu0 %v145
    %v147 = vpop.xlane.xlu0 %146
    %v148 = vsel %vm102, %v47, 0.0
    %v149 = vsel %vm102, %v79, 0.0
    %v150 = vadd.f32 %v148, %v149
    %151 = vadd.xlane.f32.xlu0 %v150
    %v152 = vpop.xlane.xlu0 %151
    %v153 = vsel %vm102, %v48, 0.0
    %v154 = vsel %vm102, %v80, 0.0
    %v155 = vadd.f32 %v153, %v154
    %156 = vadd.xlane.f32.xlu0 %v155
    %v157 = vpop.xlane.xlu0 %156
    %v158 = vsel %vm102, %v49, 0.0
    %v159 = vsel %vm102, %v81, 0.0
    %v160 = vadd.f32 %v158, %v159
    %161 = vadd.xlane.f32.xlu0 %v160
    %v162 = vpop.xlane.xlu0 %161
    %v163 = vsel %vm102, %v50, 0.0
    %v164 = vsel %vm102, %v82, 0.0
    %v165 = vadd.f32 %v163, %v164
    %166 = vadd.xlane.f32.xlu0 %v165
    %v167 = vpop.xlane.xlu0 %166
    %v168 = vsel %vm102, %v51, 0.0
    %v169 = vsel %vm102, %v83, 0.0
    %v170 = vadd.f32 %v168, %v169
    %171 = vadd.xlane.f32.xlu0 %v170
    %v172 = vpop.xlane.xlu0 %171
    %v173 = vsel %vm102, %v52, 0.0
    %v174 = vsel %vm102, %v84, 0.0
    %v175 = vadd.f32 %v173, %v174
    %176 = vadd.xlane.f32.xlu0 %v175
    %v177 = vpop.xlane.xlu0 %176
    %v178 = vsel %vm102, %v53, 0.0
    %v179 = vsel %vm102, %v85, 0.0
    %v180 = vadd.f32 %v178, %v179
    %181 = vadd.xlane.f32.xlu0 %v180
    %v182 = vpop.xlane.xlu0 %181
    %v183 = vrcp.pop 256.0
    %v184 = vmul.f32 %v107, %v183
    %v185 = vmul.f32 %v112, %v183
    %v186 = vmul.f32 %v117, %v183
    %v187 = vmul.f32 %v122, %v183
    %v188 = vmul.f32 %v127, %v183
    %v189 = vmul.f32 %v132, %v183
    %v190 = vmul.f32 %v137, %v183
    %v191 = vmul.f32 %v142, %v183
    %v192 = vmul.f32 %v147, %v183
    %v193 = vmul.f32 %v152, %v183
    %v194 = vmul.f32 %v157, %v183
    %v195 = vmul.f32 %v162, %v183
    %v196 = vmul.f32 %v167, %v183
    %v197 = vmul.f32 %v172, %v183
    %v198 = vmul.f32 %v177, %v183
    %v199 = vmul.f32 %v182, %v183
    %v200 = vld [vmem:[#allocation5] sm:$0xf]
    %v217 = vlaneseq
    %v218 = vand.u32 %v217, 127
    %v219 = vlaneseq
    %v220 = vshrl.u32 %v219, 7
    %v221 = vsub.s32 %v218, %v220
    %v222 = vrot.slane %v184, %v221
    %v223 = vlaneseq
    %v224 = vshrl.u32 %v223, 7
    %v225 = vsub.s32 %v218, %v224
    %v226 = vrot.slane %v185, %v225
    %v227 = vlaneseq
    %v228 = vshrl.u32 %v227, 7
    %v229 = vsub.s32 %v218, %v228
    %v230 = vrot.slane %v186, %v229
    %v231 = vlaneseq
    %v232 = vshrl.u32 %v231, 7
    %v233 = vsub.s32 %v218, %v232
    %v234 = vrot.slane %v187, %v233
    %v235 = vlaneseq
    %v236 = vshrl.u32 %v235, 7
    %v237 = vsub.s32 %v218, %v236
    %v238 = vrot.slane %v188, %v237
    %v239 = vlaneseq
    %v240 = vshrl.u32 %v239, 7
    %v241 = vsub.s32 %v218, %v240
    %v242 = vrot.slane %v189, %v241
    %v243 = vlaneseq
    %v244 = vshrl.u32 %v243, 7
    %v245 = vsub.s32 %v218, %v244
    %v246 = vrot.slane %v190, %v245
    %v247 = vlaneseq
    %v248 = vshrl.u32 %v247, 7
    %v249 = vsub.s32 %v218, %v248
    %v250 = vrot.slane %v191, %v249
    %v251 = vlaneseq
    %v252 = vshrl.u32 %v251, 7
    %v253 = vsub.s32 %v218, %v252
    %v254 = vrot.slane %v192, %v253
    %v255 = vlaneseq
    %v256 = vshrl.u32 %v255, 7
    %v257 = vsub.s32 %v218, %v256
    %v258 = vrot.slane %v193, %v257
    %v259 = vlaneseq
    %v260 = vshrl.u32 %v259, 7
    %v261 = vsub.s32 %v218, %v260
    %v262 = vrot.slane %v194, %v261
    %v263 = vlaneseq
    %v264 = vshrl.u32 %v263, 7
    %v265 = vsub.s32 %v218, %v264
    %v266 = vrot.slane %v195, %v265
    %v267 = vlaneseq
    %v268 = vshrl.u32 %v267, 7
    %v269 = vsub.s32 %v218, %v268
    %v270 = vrot.slane %v196, %v269
    %v271 = vlaneseq
    %v272 = vshrl.u32 %v271, 7
    %v273 = vsub.s32 %v218, %v272
    %v274 = vrot.slane %v197, %v273
    %v275 = vlaneseq
    %v276 = vshrl.u32 %v275, 7
    %v277 = vsub.s32 %v218, %v276
    %v278 = vrot.slane %v198, %v277
    %v279 = vlaneseq
    %v280 = vshrl.u32 %v279, 7
    %v281 = vsub.s32 %v218, %v280
    %v282 = vrot.slane %v199, %v281
    %vm283 = vcmask 1041409
    %v284 = vsel %vm283, %v226, %v222
    %vm285 = vcmask 1042434
    %v286 = vsel %vm285, %v230, %v284
    %vm287 = vcmask 1043459
    %v288 = vsel %vm287, %v234, %v286
    %vm289 = vcmask 1044484
    %v290 = vsel %vm289, %v238, %v288
    %vm291 = vcmask 1045509
    %v292 = vsel %vm291, %v242, %v290
    %vm293 = vcmask 1046534
    %v294 = vsel %vm293, %v246, %v292
    %vm295 = vcmask 1047559
    %v296 = vsel %vm295, %v250, %v294
    %v297 = vsel %vm283, %v258, %v254
    %v298 = vsel %vm285, %v262, %v297
    %v299 = vsel %vm287, %v266, %v298
    %v300 = vsel %vm289, %v270, %v299
    %v301 = vsel %vm291, %v274, %v300
    %v302 = vsel %vm293, %v278, %v301
    %v303 = vsel %vm295, %v282, %v302
    %vm304 = vcmask 31744
    %v305 = vsel %vm304, %v296, 0
    %v307 = vsel %vm304, %v303, 0
    %v310 = vsel %vm102, %v200, 0
    %312 = vmatprep.subr.mxu0 0.0
    %313 = vmatpush1.msra.mxu0 %v310
    %314 = vmatprep.subr.mxu0 0.0
    %315 = vmatpush1.msra.mxu0 0.0
    %316 = vmatprep.subr.mxu0 0.0
    %317 = vmatpush1.msra.mxu0 0.0
    %318 = vmatprep.subr.mxu0 0.0
    %319 = vmatpush1.msra.mxu0 0.0
    %320 = vmatprep.subr.mxu0 0.0
    %321 = vmatpush1.msra.mxu0 0.0
    %322 = vmatprep.subr.mxu0 0.0
    %323 = vmatpush1.msra.mxu0 0.0
    %324 = vmatprep.subr.mxu0 0.0
    %325 = vmatpush1.msra.mxu0 0.0
    %326 = vmatprep.subr.mxu0 0.0
    %327 = vmatpush1.msra.mxu0 0.0
    %328 = vmatprep.subr.mxu0 0.0
    %329 = vmatpush1.msra.mxu0 0.0
    %330 = vmatprep.subr.mxu0 0.0
    %331 = vmatpush1.msra.mxu0 0.0
    %332 = vmatprep.subr.mxu0 0.0
    %333 = vmatpush1.msra.mxu0 0.0
    %334 = vmatprep.subr.mxu0 0.0
    %335 = vmatpush1.msra.mxu0 0.0
    %336 = vmatprep.subr.mxu0 0.0
    %337 = vmatpush1.msra.mxu0 0.0
    %338 = vmatprep.subr.mxu0 0.0
    %339 = vmatpush1.msra.mxu0 0.0
    %340 = vmatprep.subr.mxu0 0.0
    %341 = vmatpush1.msra.mxu0 0.0
    %342 = vmatprep.subr.mxu0 0.0
    %343 = vmatpush1.msra.mxu0 0.0
    %344 = vmatprep.subr.mxu0 0.0
    %345 = vmatpush1.msra.mxu0 0.0
    %346 = vmatprep.subr.mxu0 0.0
    %347 = vmatpush1.msra.mxu0 0.0
    %348 = vmatprep.subr.mxu0 0.0
    %349 = vmatpush1.msra.mxu0 0.0
    %350 = vmatprep.subr.mxu0 0.0
    %351 = vmatpush1.msra.mxu0 0.0
    %352 = vmatprep.subr.mxu0 0.0
    %353 = vmatpush1.msra.mxu0 0.0
    %354 = vmatprep.subr.mxu0 0.0
    %355 = vmatpush1.msra.mxu0 0.0
    %356 = vmatprep.subr.mxu0 0.0
    %357 = vmatpush1.msra.mxu0 0.0
    %358 = vmatprep.subr.mxu0 0.0
    %359 = vmatpush1.msra.mxu0 0.0
    %360 = vmatprep.subr.mxu0 0.0
    %361 = vmatpush1.msra.mxu0 0.0
    %362 = vmatprep.subr.mxu0 0.0
    %363 = vmatpush1.msra.mxu0 0.0
    %364 = vmatprep.subr.mxu0 0.0
    %365 = vmatpush1.msra.mxu0 0.0
    %366 = vmatprep.subr.mxu0 0.0
    %367 = vmatpush1.msra.mxu0 0.0
    %368 = vmatprep.subr.mxu0 0.0
    %369 = vmatpush1.msra.mxu0 0.0
    %370 = vmatprep.subr.mxu0 0.0
    %371 = vmatpush1.msra.mxu0 0.0
    %372 = vmatprep.subr.mxu0 0.0
    %373 = vmatpush1.msra.mxu0 0.0
    %374 = vmatprep.subr.mxu0 0.0
    %375 = vmatpush1.msra.mxu0 0.0
    %376 = vmatprep.mubr.f32.mxu0 0.0
    %377 = vmatmul.mubr.f32.gmra.mrb[0].mxu0 %v305
    %v378 = vpop.f32.mrb[0].mxu0
    %v379 = vadd.f32 0.0, %v378
    %v380 = vpop.f32.mrb[0].mxu0
    %381 = vmatprep.mubr.f32.mxu0 0.0
    %382 = vmatmul.mubr.f32.gmra.mrb[0].mxu0 %v307
    %v383 = vpop.f32.mrb[0].mxu0
    %v384 = vadd.f32 0.0, %v383
    %v385 = vpop.f32.mrb[0].mxu0
    %386 = vdwg.mxu0
    %v387 = vmul.f32 %v379, %v379
    %v388 = vmul.f32 %v384, %v384
    %vm389 = vcmask 261120
    %v390 = vsel %vm389, %v387, 0.0
    %391 = vadd.xlane.f32.xlu0 %v390
    %v392 = vpop.xlane.xlu0 %391
    %v393 = vsel %vm389, %v388, 0.0
    %394 = vadd.xlane.f32.xlu0 %v393
    %v395 = vpop.xlane.xlu0 %394
    %v396 = vmax.f32 %v392, 1e-24
    %v397 = vmax.f32 %v395, 1e-24
    %v398 = vrsqrt.pop %v396
    %v399 = vrsqrt.pop %v397
    %v400 = vmul.f32 %v379, %v398
    %v401 = vmul.f32 %v384, %v399
    %v402 = vpack.c.bf16 %v401, %v400
    %v404 = vunpack.c.l.b16 %v402
    %v405 = vunpack.c.h.b16 %v402
    %v406 = vpack.c.b16 %v404, %v404
    %v407 = vpack.c.b16 %v405, %v405
    %vm410 = vcmask 257024
    %411 = vst.msk [vmem:[#allocation7] sm:$0xf] %vm410, %v406
    %412 = vst.msk [vmem:[#allocation7 + $0x4] sm:$0xf] %vm410, %v407
    // Predicated region
    $region18: #{tpu_custom_call.1} parent=1 // pred_check
      _
    $region19: #{tpu_custom_call.1} parent=1 // pred_check_branch
      %414 = sbr.rel (0) target = $region21
    $region20: #{tpu_custom_call.1} parent=1 // pred_region
      %s416 = ssub.s32 128, 128
      %417 = vsyncadd [#allocation4], %s416
      %s418 = sshll.u32 [#allocation7], 4
      %s419 = int_to_ptr.vmem [resolvable:$true] %s418
      %424 = dma.vmem_to_hbm [thread:$0]  %s419, 128, %s2, [#allocation4], 64, 64, 4
    $region21: #{tpu_custom_call.1} parent=1 // pred_fallthru
      _
    // Predicated region
    $region22: #{tpu_custom_call.1} parent=1 // pred_check
      _
    $region23: #{tpu_custom_call.1} parent=1 // pred_check_branch
      %426 = sbr.rel (0) target = $region25
    $region24: #{tpu_custom_call.1} parent=1 // pred_region
      %427 = dma.done [#allocation4], 128
    $region25: #{tpu_custom_call.1} parent=1 // pred_fallthru
      _
    %428 = vsyncpa [#allocation3], 1
    %429 = vsyncpa [#allocation6], 1
    %430 = vsyncpa [#allocation4], 1

</llo_original>
